<compile_context>
chip_gen: v5e
topology: v5e:2x2
jax: 0.10.0
libtpu: 0.0.40
codegen_flags: <defaults>
</compile_context>

<pallas_src>
import jax
import jax.numpy as jnp
from jax.experimental import pallas as pl
from jax.experimental.pallas import tpu as pltpu


def _mlstm_kernel(x_ref, h_ref, c_ref, wmx_ref, wmh_ref, wx_ref, wh_ref, b_ref, hc_ref):
    H = c_ref.shape[1]
    f32 = jnp.float32

    x      = x_ref[...]        # (bb, D)  bf16
    h_prev = h_ref[...]        # (bb, H)  bf16
    c_prev = c_ref[...]        # (bb, H)  f32

    # Multiplicative branch: two small MXU pushes (no zero-padded block-diagonal).
    mm_x = jnp.dot(x,      wmx_ref[...], preferred_element_type=f32)   # (bb, H)
    mm_h = jnp.dot(h_prev, wmh_ref[...], preferred_element_type=f32)   # (bb, H)
    m = mm_x * mm_h                                                    # (bb, H) f32

    # Gate branch: two dots against separate resident weights (x@wx is independent of
    # the multiplicative branch, so the MXU can overlap the two).
    z = jnp.dot(x, wx_ref[...], preferred_element_type=f32)            # (bb, 4H)
    z = z + jnp.dot(m.astype(jnp.bfloat16), wh_ref[...],
                    preferred_element_type=f32)
    z = z + b_ref[...]

    # One full-tile sigmoid pass (EUP), static lane slices for i/f/o; tanh on u only.
    s = jax.nn.sigmoid(z)
    i = s[:, 0 * H:1 * H]
    f = s[:, 1 * H:2 * H]
    o = s[:, 2 * H:3 * H]
    u = jnp.tanh(z[:, 3 * H:4 * H])

    c = f * c_prev + i * u
    h = o * jnp.tanh(c)

    # Single lane-dense output slab [h | c].
    hc_ref[...] = jnp.concatenate([h, c], axis=1)


def _normalize_cols(w, g, eps=1e-12):
    # torch.nn.functional.normalize(w, dim=0, p=2) * g  (exact torch formulation)
    norm = jnp.sqrt(jnp.sum(w * w, axis=0, keepdims=True))
    return (w / jnp.maximum(norm, eps)) * g[None, :]


def prepare_weights(params):
    """Step-invariant preprocessing.  Call ONCE per forward (outside any time scan):
    weight-norm in f32, then cast matmul operands to bf16."""
    f32, bf16 = jnp.float32, jnp.bfloat16
    return {
        "wx":  _normalize_cols(params["wx"].astype(f32),  params["gx"].astype(f32)).astype(bf16),
        "wh":  _normalize_cols(params["wh"].astype(f32),  params["gh"].astype(f32)).astype(bf16),
        "wmx": _normalize_cols(params["wmx"].astype(f32), params["gmx"].astype(f32)).astype(bf16),
        "wmh": _normalize_cols(params["wmh"].astype(f32), params["gmh"].astype(f32)).astype(bf16),
        "b":   params["b"].reshape(1, -1).astype(f32),
    }


def _round_up(x, m):
    return ((x + m - 1) // m) * m


_SUBLANE = 16  # bf16 activation tiles: keep sublane counts multiples of 16


def _choose_block_b(B):
    if B <= _SUBLANE:
        return _SUBLANE
    if B <= 256:
        # >= 2 grid points so the 'parallel' batch axis shards across both
        # TensorCores on v7x (harmless on single-TC v5e/v6e).
        return _round_up(pl.cdiv(B, 2), _SUBLANE)
    # Large batch: bounded activation tile that fits v7x's 64 MiB VMEM while still
    # amortizing the ~0.35 us per-grid-step overhead on v5e/v6e.
    return 256


def mlstm_cell_prepared(inputs, state, prepared):
    """Forward pass given weights already processed by prepare_weights()."""
    c_prev, h_prev = state
    B, D_in = inputs.shape
    H = h_prev.shape[1]
    f32, bf16 = jnp.float32, jnp.bfloat16

    block_b = _choose_block_b(B)
    B_pad = _round_up(B, block_b)
    grid = (B_pad // block_b,)

    x  = inputs.astype(bf16)
    hp = h_prev.astype(bf16)
    cp = c_prev.astype(f32)
    if B_pad != B:
        pad = ((0, B_pad - B), (0, 0))
        x, hp, cp = jnp.pad(x, pad), jnp.pad(hp, pad), jnp.pad(cp, pad)

    hc = pl.pallas_call(
        _mlstm_kernel,
        grid=grid,
        in_specs=[
            pl.BlockSpec((block_b, D_in), lambda i: (i, 0)),   # x tile        (bf16)
            pl.BlockSpec((block_b, H),    lambda i: (i, 0)),   # h_prev tile   (bf16)
            pl.BlockSpec((block_b, H),    lambda i: (i, 0)),   # c_prev tile   (f32)
            pl.BlockSpec((D_in, H),       lambda i: (0, 0)),   # wmx  (resident, bf16)
            pl.BlockSpec((H, H),          lambda i: (0, 0)),   # wmh  (resident, bf16)
            pl.BlockSpec((D_in, 4 * H),   lambda i: (0, 0)),   # wx   (resident, bf16)
            pl.BlockSpec((H, 4 * H),      lambda i: (0, 0)),   # wh   (resident, bf16)
            pl.BlockSpec((1, 4 * H),      lambda i: (0, 0)),   # bias (resident, f32)
        ],
        out_specs=pl.BlockSpec((block_b, 2 * H), lambda i: (i, 0)),
        out_shape=jax.ShapeDtypeStruct((B_pad, 2 * H), f32),
        compiler_params=pltpu.CompilerParams(
            dimension_semantics=("parallel",),
            vmem_limit_bytes=64 * 1024 * 1024,
        ),
    )(x, hp, cp,
      prepared["wmx"], prepared["wmh"], prepared["wx"], prepared["wh"], prepared["b"])

    h = hc[:B, :H]
    c = hc[:B, H:]
    return h, (c, h)


def mlstm_cell(inputs, state, params):
    """Pallas forward pass matching mLSTMCell.forward.

    inputs: [B, D_in]
    state : (c_prev [B, H], h_prev [B, H])
    params: dict with wx, wh, wmx, wmh, b, gx, gh, gmx, gmh
    returns (h, (c, h)) exactly like the PyTorch module.
    """
    return mlstm_cell_prepared(inputs, state, prepare_weights(params))


def _reference(inputs, state, params):
    """Pure-JAX f32 reference mirroring the PyTorch forward (for self-check)."""
    c_prev, h_prev = state
    eps = 1e-12

    def nrm(w, g):
        n = jnp.sqrt(jnp.sum(w * w, axis=0, keepdims=True))
        return (w / jnp.maximum(n, eps)) * g

    H = h_prev.shape[1]
    wx  = nrm(params["wx"],  params["gx"][None, :])
    wh  = nrm(params["wh"],  params["gh"][None, :])
    wmx = nrm(params["wmx"], params["gmx"][None, :])
    wmh = nrm(params["wmh"], params["gmh"][None, :])
    m = (inputs @ wmx) * (h_prev @ wmh)
    z = inputs @ wx + m @ wh + params["b"][None, :]
    i, f, o, u = (z[:, :H], z[:, H:2 * H], z[:, 2 * H:3 * H], z[:, 3 * H:])
    i, f, o, u = jax.nn.sigmoid(i), jax.nn.sigmoid(f), jax.nn.sigmoid(o), jnp.tanh(u)
    c = f * c_prev + i * u
    h = o * jnp.tanh(c)
    return h, (c, h)


if __name__ == "__main__":
    # H=64 -> gate width 4H=256 lanes, output slab 2H=128 lanes (unmasked stores);
    # B=32 -> block_b=16, grid=(2,) exercises the multi-tile 'parallel' path.
    B, D_in, H = 32, 64, 64
    key = jax.random.PRNGKey(0)
    ks = jax.random.split(key, 12)

    params = {
        "wx":  jax.random.normal(ks[0], (D_in, 4 * H), jnp.float32) * 0.1,
        "wh":  jax.random.normal(ks[1], (H,    4 * H), jnp.float32) * 0.1,
        "wmx": jax.random.normal(ks[2], (D_in, H),     jnp.float32) * 0.1,
        "wmh": jax.random.normal(ks[3], (H,    H),     jnp.float32) * 0.1,
        "b":   jax.random.normal(ks[4], (4 * H,),      jnp.float32) * 0.1,
        "gx":  1.0 + 0.1 * jax.random.normal(ks[5], (4 * H,), jnp.float32),
        "gh":  1.0 + 0.1 * jax.random.normal(ks[6], (4 * H,), jnp.float32),
        "gmx": 1.0 + 0.1 * jax.random.normal(ks[7], (H,),     jnp.float32),
        "gmh": 1.0 + 0.1 * jax.random.normal(ks[8], (H,),     jnp.float32),
    }

    inputs = jax.random.normal(ks[9],  (B, D_in), jnp.float32)
    c_prev = jax.random.normal(ks[10], (B, H),    jnp.float32)
    h_prev = jax.random.normal(ks[11], (B, H),    jnp.float32)

    h, (c, h2) = mlstm_cell(inputs, (c_prev, h_prev), params)
    jax.block_until_ready((h, c, h2))

    h_ref, (c_ref, _) = _reference(inputs, (c_prev, h_prev), params)
    # Tolerance reflects bf16 matmul operands (f32 accumulation), per review guidance.
    assert jnp.allclose(h, h_ref, atol=5e-2, rtol=5e-2), "h mismatch vs reference"
    assert jnp.allclose(c, c_ref, atol=5e-2, rtol=5e-2), "c mismatch vs reference"
    assert jnp.allclose(h2, h, atol=0.0), "returned state h must equal output h"

    print("KERNEL_OK")
</pallas_src>

<mosaic_0001>
module attributes {stable_mosaic.version = 11 : i64} {
  func.func @_mlstm_kernel(%arg0: i32, %arg1: memref<16x64xbf16, #tpu.memory_space<vmem>>, %arg2: memref<16x64xbf16, #tpu.memory_space<vmem>>, %arg3: memref<16x64xf32, #tpu.memory_space<vmem>>, %arg4: memref<64x64xbf16, #tpu.memory_space<vmem>>, %arg5: memref<64x64xbf16, #tpu.memory_space<vmem>>, %arg6: memref<64x256xbf16, #tpu.memory_space<vmem>>, %arg7: memref<64x256xbf16, #tpu.memory_space<vmem>>, %arg8: memref<1x256xf32, #tpu.memory_space<vmem>>, %arg9: memref<16x128xf32, #tpu.memory_space<vmem>>) attributes {dimension_semantics = [#tpu.dimension_semantics<parallel>], iteration_bounds = array<i64: 2>, scalar_prefetch = 0 : i64, scratch_operands = 0 : i64, tpu.core_type = #tpu.core_type<tc>, window_params = [{transform_indices = @transform_0, window_bounds = array<i64: 16, 64>}, {transform_indices = @transform_1, window_bounds = array<i64: 16, 64>}, {transform_indices = @transform_2, window_bounds = array<i64: 16, 64>}, {pipeline_mode = #tpu.pipeline_mode<synchronous>, transform_indices = @transform_3, window_bounds = array<i64: 64, 64>}, {pipeline_mode = #tpu.pipeline_mode<synchronous>, transform_indices = @transform_4, window_bounds = array<i64: 64, 64>}, {pipeline_mode = #tpu.pipeline_mode<synchronous>, transform_indices = @transform_5, window_bounds = array<i64: 64, 256>}, {pipeline_mode = #tpu.pipeline_mode<synchronous>, transform_indices = @transform_6, window_bounds = array<i64: 64, 256>}, {pipeline_mode = #tpu.pipeline_mode<synchronous>, transform_indices = @transform_7, window_bounds = array<i64: 1, 256>}, {transform_indices = @transform_8, window_bounds = array<i64: 16, 128>}]} {
    %c0 = arith.constant 0 : index
    %c0_0 = arith.constant 0 : index
    %0 = vector.load %arg1[%c0, %c0_0] : memref<16x64xbf16, #tpu.memory_space<vmem>>, vector<16x64xbf16>
    %c0_1 = arith.constant 0 : index
    %c0_2 = arith.constant 0 : index
    %1 = vector.load %arg2[%c0_1, %c0_2] : memref<16x64xbf16, #tpu.memory_space<vmem>>, vector<16x64xbf16>
    %c0_3 = arith.constant 0 : index
    %c0_4 = arith.constant 0 : index
    %2 = vector.load %arg3[%c0_3, %c0_4] : memref<16x64xf32, #tpu.memory_space<vmem>>, vector<16x64xf32>
    %c0_5 = arith.constant 0 : index
    %c0_6 = arith.constant 0 : index
    %3 = vector.load %arg4[%c0_5, %c0_6] : memref<64x64xbf16, #tpu.memory_space<vmem>>, vector<64x64xbf16>
    %cst = arith.constant dense<0.000000e+00> : vector<16x64xf32>
    %4 = tpu.matmul %0, %3, %cst {dimension_numbers = #tpu.dot_dimension_numbers<[1], [0], [0], [1], [0, 0, 1, 1], [], []>} : vector<16x64xbf16>, vector<64x64xbf16>, vector<16x64xf32> -> vector<16x64xf32>
    %c0_7 = arith.constant 0 : index
    %c0_8 = arith.constant 0 : index
    %5 = vector.load %arg5[%c0_7, %c0_8] : memref<64x64xbf16, #tpu.memory_space<vmem>>, vector<64x64xbf16>
    %cst_9 = arith.constant dense<0.000000e+00> : vector<16x64xf32>
    %6 = tpu.matmul %1, %5, %cst_9 {dimension_numbers = #tpu.dot_dimension_numbers<[1], [0], [0], [1], [0, 0, 1, 1], [], []>} : vector<16x64xbf16>, vector<64x64xbf16>, vector<16x64xf32> -> vector<16x64xf32>
    %7 = arith.mulf %4, %6 : vector<16x64xf32>
    %c0_10 = arith.constant 0 : index
    %c0_11 = arith.constant 0 : index
    %8 = vector.load %arg6[%c0_10, %c0_11] : memref<64x256xbf16, #tpu.memory_space<vmem>>, vector<64x256xbf16>
    %cst_12 = arith.constant dense<0.000000e+00> : vector<16x256xf32>
    %9 = tpu.matmul %0, %8, %cst_12 {dimension_numbers = #tpu.dot_dimension_numbers<[1], [0], [0], [1], [0, 0, 1, 1], [], []>} : vector<16x64xbf16>, vector<64x256xbf16>, vector<16x256xf32> -> vector<16x256xf32>
    %10 = arith.truncf %7 : vector<16x64xf32> to vector<16x64xbf16>
    %c0_13 = arith.constant 0 : index
    %c0_14 = arith.constant 0 : index
    %11 = vector.load %arg7[%c0_13, %c0_14] : memref<64x256xbf16, #tpu.memory_space<vmem>>, vector<64x256xbf16>
    %cst_15 = arith.constant dense<0.000000e+00> : vector<16x256xf32>
    %12 = tpu.matmul %10, %11, %cst_15 {dimension_numbers = #tpu.dot_dimension_numbers<[1], [0], [0], [1], [0, 0, 1, 1], [], []>} : vector<16x64xbf16>, vector<64x256xbf16>, vector<16x256xf32> -> vector<16x256xf32>
    %13 = arith.addf %9, %12 : vector<16x256xf32>
    %c0_16 = arith.constant 0 : index
    %c0_17 = arith.constant 0 : index
    %14 = vector.load %arg8[%c0_16, %c0_17] : memref<1x256xf32, #tpu.memory_space<vmem>>, vector<1x256xf32>
    %15 = vector.broadcast %14 : vector<1x256xf32> to vector<16x256xf32>
    %16 = arith.addf %13, %15 : vector<16x256xf32>
    %17 = arith.negf %16 : vector<16x256xf32>
    %18 = math.exp %17 : vector<16x256xf32>
    %cst_18 = arith.constant 1.000000e+00 : f32
    %19 = vector.broadcast %cst_18 : f32 to vector<16x256xf32>
    %20 = arith.addf %19, %18 : vector<16x256xf32>
    %21 = arith.divf %19, %20 : vector<16x256xf32>
    %22 = vector.extract_strided_slice %21 {offsets = [0, 0], sizes = [16, 64], strides = [1, 1]} : vector<16x256xf32> to vector<16x64xf32>
    %23 = vector.extract_strided_slice %21 {offsets = [0, 64], sizes = [16, 64], strides = [1, 1]} : vector<16x256xf32> to vector<16x64xf32>
    %24 = vector.extract_strided_slice %21 {offsets = [0, 128], sizes = [16, 64], strides = [1, 1]} : vector<16x256xf32> to vector<16x64xf32>
    %25 = vector.extract_strided_slice %16 {offsets = [0, 192], sizes = [16, 64], strides = [1, 1]} : vector<16x256xf32> to vector<16x64xf32>
    %26 = math.tanh %25 : vector<16x64xf32>
    %27 = arith.mulf %23, %2 : vector<16x64xf32>
    %28 = arith.mulf %22, %26 : vector<16x64xf32>
    %29 = arith.addf %27, %28 : vector<16x64xf32>
    %30 = math.tanh %29 : vector<16x64xf32>
    %31 = arith.mulf %24, %30 : vector<16x64xf32>
    %32 = tpu.concatenate %31, %29 in 1 : vector<16x64xf32>, vector<16x64xf32> -> vector<16x128xf32>
    %c0_19 = arith.constant 0 : index
    %c0_20 = arith.constant 0 : index
    %33 = vector.load %arg9[%c0_19, %c0_20] : memref<16x128xf32, #tpu.memory_space<vmem>>, vector<16x128xf32>
    tpu.vector_store %arg9[%c0_19, %c0_20], %32 {strides = array<i32>} : memref<16x128xf32, #tpu.memory_space<vmem>>, vector<16x128xf32>,
    return
  }
  func.func @transform_0(%arg0: i32) -> (i32, i32) {
    %c0_i32 = arith.constant 0 : i32
    %c0_i32_0 = arith.constant 0 : i32
    return %arg0, %c0_i32 : i32, i32
  }
  func.func @transform_1(%arg0: i32) -> (i32, i32) {
    %c0_i32 = arith.constant 0 : i32
    %c0_i32_0 = arith.constant 0 : i32
    return %arg0, %c0_i32 : i32, i32
  }
  func.func @transform_2(%arg0: i32) -> (i32, i32) {
    %c0_i32 = arith.constant 0 : i32
    %c0_i32_0 = arith.constant 0 : i32
    return %arg0, %c0_i32 : i32, i32
  }
  func.func @transform_3(%arg0: i32) -> (i32, i32) {
    %c0_i32 = arith.constant 0 : i32
    %c0_i32_0 = arith.constant 0 : i32
    %c0_i32_1 = arith.constant 0 : i32
    return %c0_i32, %c0_i32_0 : i32, i32
  }
  func.func @transform_4(%arg0: i32) -> (i32, i32) {
    %c0_i32 = arith.constant 0 : i32
    %c0_i32_0 = arith.constant 0 : i32
    %c0_i32_1 = arith.constant 0 : i32
    return %c0_i32, %c0_i32_0 : i32, i32
  }
  func.func @transform_5(%arg0: i32) -> (i32, i32) {
    %c0_i32 = arith.constant 0 : i32
    %c0_i32_0 = arith.constant 0 : i32
    %c0_i32_1 = arith.constant 0 : i32
    return %c0_i32, %c0_i32_0 : i32, i32
  }
  func.func @transform_6(%arg0: i32) -> (i32, i32) {
    %c0_i32 = arith.constant 0 : i32
    %c0_i32_0 = arith.constant 0 : i32
    %c0_i32_1 = arith.constant 0 : i32
    return %c0_i32, %c0_i32_0 : i32, i32
  }
  func.func @transform_7(%arg0: i32) -> (i32, i32) {
    %c0_i32 = arith.constant 0 : i32
    %c0_i32_0 = arith.constant 0 : i32
    %c0_i32_1 = arith.constant 0 : i32
    return %c0_i32, %c0_i32_0 : i32, i32
  }
  func.func @transform_8(%arg0: i32) -> (i32, i32) {
    %c0_i32 = arith.constant 0 : i32
    %c0_i32_0 = arith.constant 0 : i32
    return %arg0, %c0_i32 : i32, i32
  }
}

</mosaic_0001>

<llo_original>
// kernel: tpu_custom_call.1
$region0: #{tpu_custom_call.1}
  #allocation0 [shape = 'u32[]', space=smem, size = 0x4, offset = 0x4, fixed_abs, tag = 'smem constant byte address 0x4 - core index']
  #allocation1 [shape = 'u32[72,128]{1,0:T(1,128)}', space=vmem, size = 0x9000, scoped, tag = 'internal scratch']
  %s0 = inlined_call_operand.hbm [shape: bf16[32,64], index: 0, kind: input, shape index: {}]
  %s1 = inlined_call_operand.hbm [shape: bf16[32,64], index: 1, kind: input, shape index: {}]
  %s2 = inlined_call_operand.hbm [shape: f32[32,64], index: 2, kind: input, shape index: {}]
  %s3 = inlined_call_operand.hbm [shape: bf16[64,64], index: 3, kind: input, shape index: {}]
  %s4 = inlined_call_operand.hbm [shape: bf16[64,64], index: 4, kind: input, shape index: {}]
  %s5 = inlined_call_operand.hbm [shape: bf16[64,256], index: 5, kind: input, shape index: {}]
  %s6 = inlined_call_operand.hbm [shape: bf16[64,256], index: 6, kind: input, shape index: {}]
  %s7 = inlined_call_operand.vmem [shape: f32[1,256], index: 7, kind: input, shape index: {}]
  %s8 = inlined_call_operand.hbm [shape: f32[32,128], index: 8, kind: output, shape index: {}]
  %s9 = sld [smem:[#allocation0]]
  $region93: #{tpu_custom_call.1} parent=0
    _
  %s11 = ssub.s32 1, %s9
  %s12 = scalar_select 0, %s11, %s9
  $region1: #{tpu_custom_call.1} parent=0
    #allocation2 [shape = 'u8[8192]{0}', space=vmem, size = 0x2000, scoped, tag = 'input window, operand 0']
    #allocation3 [shape = 's32[2]{0}', space=sflag, size = 0x8, scoped, tag = 'scoped memory for tpu_custom_call.1']
    #allocation4 [shape = 's32[2]{0}', space=sflag, size = 0x8, scoped, tag = 'scoped memory for tpu_custom_call.1']
    #allocation5 [shape = 'u8[8192]{0}', space=vmem, size = 0x2000, scoped, tag = 'input window, operand 1']
    #allocation6 [shape = 's32[2]{0}', space=sflag, size = 0x8, scoped, tag = 'scoped memory for tpu_custom_call.1']
    #allocation7 [shape = 'u8[16384]{0}', space=vmem, size = 0x4000, scoped, tag = 'input window, operand 2']
    #allocation8 [shape = 'u8[16384]{0}', space=vmem, size = 0x4000, scoped, tag = 'input window, operand 3, single buffered']
    #allocation9 [shape = 's32[1]{0}', space=sflag, size = 0x4, scoped, tag = 'scoped memory for tpu_custom_call.1']
    #allocation10 [shape = 'u8[16384]{0}', space=vmem, size = 0x4000, scoped, tag = 'input window, operand 4, single buffered']
    #allocation11 [shape = 'u8[32768]{0}', space=vmem, size = 0x8000, scoped, tag = 'input window, operand 5, single buffered']
    #allocation12 [shape = 's32[1]{0}', space=sflag, size = 0x4, scoped, tag = 'scoped memory for tpu_custom_call.1']
    #allocation13 [shape = 'u8[32768]{0}', space=vmem, size = 0x8000, scoped, tag = 'input window, operand 6, single buffered']
    #allocation14 [shape = 'u8[16384]{0}', space=vmem, size = 0x4000, scoped, tag = 'output window, operand 0']
    %13 = vsyncpa [#allocation3], 0
    %s14 = scalar_lea.sflag [#allocation3], 1
    %15 = vsyncpa %s14, 0
    %16 = vsyncpa [#allocation6], 0
    %s17 = scalar_lea.sflag [#allocation6], 1
    %18 = vsyncpa %s17, 0
    %19 = vsyncpa [#allocation9], 0
    %20 = vsyncpa [#allocation12], 0
    %21 = vsyncpa [#allocation4], 0
    %s22 = scalar_lea.sflag [#allocation4], 1
    %23 = vsyncpa %s22, 0
    loop: start=0, step=1, limit=4
    $region2: #{tpu_custom_call.1} parent=1 // loop_pre_header
      _
    $region3: #{tpu_custom_call.1} parent=1 // loop_header
      %s25 = sphi 0, %s29
      %p26 = scmp.ge.s32.totalorder %s25, 4
      %s35 = sphi 0, %s37
      %s38 = sphi 0, %s35
      %s39 = sphi 0, %s38
      %s55 = sphi 0, %s39
      %s61 = sphi 0, %s63
      %s64 = sphi 0, %s61
      %s65 = sphi 0, %s64
      %s81 = sphi 0, %s65
      %s87 = sphi 0, %s89
      %s90 = sphi 0, %s87
      %s91 = sphi 0, %s90
      %s107 = sphi 0, %s91
      %s111 = sphi 0, %s111
      %s113 = sphi 0, %s111
      %s114 = sphi 0, %s113
      %s128 = sphi 0, %s114
      %s132 = sphi 0, %s132
      %s134 = sphi 0, %s132
      %s135 = sphi 0, %s134
      %s149 = sphi 0, %s135
      %s153 = sphi 0, %s153
      %s155 = sphi 0, %s153
      %s156 = sphi 0, %s155
      %s170 = sphi 0, %s156
      %s174 = sphi 0, %s174
      %s176 = sphi 0, %s174
      %s177 = sphi 0, %s176
      %s191 = sphi 0, %s177
      %s195 = sphi 0, %s195
      %s197 = sphi 0, %s195
      %s198 = sphi 0, %s197
      %s212 = sphi 0, %s198
      %s218 = sphi 0, %s220
      %s221 = sphi 0, %s218
      %s222 = sphi 0, %s221
      %s238 = sphi 0, %s222
    $region4: #{tpu_custom_call.1} parent=1 // loop_header_branch
      %28 = sbr.rel (%p26) target = $region8
    $region5: #{tpu_custom_call.1} parent=1 // loop_body
      %s30 = ssub.s32 %s25, 1
      %s31 = ssub.s32 %s25, 2
      %s32 = sadd.s32 %s25, 1
      %s33 = ssub.s32 %s25, %s32
      %p34 = scmp.eq.s32.totalorder %s33, 0
      %s36 = sadd.s32 %s35, 1
      %s37 = scalar_select %p34, %s35, %s36
      %p40 = pneg %p34
      %p41 = scmp.eq.s32.totalorder %s25, 1
      %p42 = por %p40, %p41
      %p43 = scmp.ne.s32.totalorder %s35, %s38
      %p44 = scmp.eq.s32.totalorder %s25, 0
      %p45 = por %p43, %p44
      %p46 = scmp.ne.s32.totalorder %s35, %s38
      %p47 = scmp.eq.s32.totalorder %s30, 1
      %p48 = por %p46, %p47
      %p49 = scmp.ne.s32.totalorder %s38, %s39
      %p50 = scmp.eq.s32.totalorder %s30, 0
      %p51 = por %p49, %p50
      %p52 = scmp.ne.s32.totalorder %s38, %s39
      %p53 = scmp.eq.s32.totalorder %s31, 1
      %p54 = por %p52, %p53
      %p56 = scmp.ne.s32.totalorder %s39, %s55
      %p57 = scmp.eq.s32.totalorder %s31, 0
      %p58 = por %p56, %p57
      %s59 = ssub.s32 %s25, %s32
      %p60 = scmp.eq.s32.totalorder %s59, 0
      %s62 = sadd.s32 %s61, 1
      %s63 = scalar_select %p60, %s61, %s62
      %p66 = pneg %p60
      %p67 = scmp.eq.s32.totalorder %s25, 1
      %p68 = por %p66, %p67
      %p69 = scmp.ne.s32.totalorder %s61, %s64
      %p70 = scmp.eq.s32.totalorder %s25, 0
      %p71 = por %p69, %p70
      %p72 = scmp.ne.s32.totalorder %s61, %s64
      %p73 = scmp.eq.s32.totalorder %s30, 1
      %p74 = por %p72, %p73
      %p75 = scmp.ne.s32.totalorder %s64, %s65
      %p76 = scmp.eq.s32.totalorder %s30, 0
      %p77 = por %p75, %p76
      %p78 = scmp.ne.s32.totalorder %s64, %s65
      %p79 = scmp.eq.s32.totalorder %s31, 1
      %p80 = por %p78, %p79
      %p82 = scmp.ne.s32.totalorder %s65, %s81
      %p83 = scmp.eq.s32.totalorder %s31, 0
      %p84 = por %p82, %p83
      %s85 = ssub.s32 %s25, %s32
      %p86 = scmp.eq.s32.totalorder %s85, 0
      %s88 = sadd.s32 %s87, 1
      %s89 = scalar_select %p86, %s87, %s88
      %p92 = pneg %p86
      %p93 = scmp.eq.s32.totalorder %s25, 1
      %p94 = por %p92, %p93
      %p95 = scmp.ne.s32.totalorder %s87, %s90
      %p96 = scmp.eq.s32.totalorder %s25, 0
      %p97 = por %p95, %p96
      %p98 = scmp.ne.s32.totalorder %s87, %s90
      %p99 = scmp.eq.s32.totalorder %s30, 1
      %p100 = por %p98, %p99
      %p101 = scmp.ne.s32.totalorder %s90, %s91
      %p102 = scmp.eq.s32.totalorder %s30, 0
      %p103 = por %p101, %p102
      %p104 = scmp.ne.s32.totalorder %s90, %s91
      %p105 = scmp.eq.s32.totalorder %s31, 1
      %p106 = por %p104, %p105
      %p108 = scmp.ne.s32.totalorder %s91, %s107
      %p109 = scmp.eq.s32.totalorder %s31, 0
      %p110 = por %p108, %p109
      %s112 = sadd.s32 %s111, 1
      %p115 = scmp.eq.s32.totalorder %s25, 1
      %p116 = scmp.ne.s32.totalorder %s111, %s113
      %p117 = scmp.eq.s32.totalorder %s25, 0
      %p118 = por %p116, %p117
      %p119 = scmp.ne.s32.totalorder %s111, %s113
      %p120 = scmp.eq.s32.totalorder %s30, 1
      %p121 = por %p119, %p120
      %p122 = scmp.ne.s32.totalorder %s113, %s114
      %p123 = scmp.eq.s32.totalorder %s30, 0
      %p124 = por %p122, %p123
      %p125 = scmp.ne.s32.totalorder %s113, %s114
      %p126 = scmp.eq.s32.totalorder %s31, 1
      %p127 = por %p125, %p126
      %p129 = scmp.ne.s32.totalorder %s114, %s128
      %p130 = scmp.eq.s32.totalorder %s31, 0
      %p131 = por %p129, %p130
      %s133 = sadd.s32 %s132, 1
      %p136 = scmp.eq.s32.totalorder %s25, 1
      %p137 = scmp.ne.s32.totalorder %s132, %s134
      %p138 = scmp.eq.s32.totalorder %s25, 0
      %p139 = por %p137, %p138
      %p140 = scmp.ne.s32.totalorder %s132, %s134
      %p141 = scmp.eq.s32.totalorder %s30, 1
      %p142 = por %p140, %p141
      %p143 = scmp.ne.s32.totalorder %s134, %s135
      %p144 = scmp.eq.s32.totalorder %s30, 0
      %p145 = por %p143, %p144
      %p146 = scmp.ne.s32.totalorder %s134, %s135
      %p147 = scmp.eq.s32.totalorder %s31, 1
      %p148 = por %p146, %p147
      %p150 = scmp.ne.s32.totalorder %s135, %s149
      %p151 = scmp.eq.s32.totalorder %s31, 0
      %p152 = por %p150, %p151
      %s154 = sadd.s32 %s153, 1
      %p157 = scmp.eq.s32.totalorder %s25, 1
      %p158 = scmp.ne.s32.totalorder %s153, %s155
      %p159 = scmp.eq.s32.totalorder %s25, 0
      %p160 = por %p158, %p159
      %p161 = scmp.ne.s32.totalorder %s153, %s155
      %p162 = scmp.eq.s32.totalorder %s30, 1
      %p163 = por %p161, %p162
      %p164 = scmp.ne.s32.totalorder %s155, %s156
      %p165 = scmp.eq.s32.totalorder %s30, 0
      %p166 = por %p164, %p165
      %p167 = scmp.ne.s32.totalorder %s155, %s156
      %p168 = scmp.eq.s32.totalorder %s31, 1
      %p169 = por %p167, %p168
      %p171 = scmp.ne.s32.totalorder %s156, %s170
      %p172 = scmp.eq.s32.totalorder %s31, 0
      %p173 = por %p171, %p172
      %s175 = sadd.s32 %s174, 1
      %p178 = scmp.eq.s32.totalorder %s25, 1
      %p179 = scmp.ne.s32.totalorder %s174, %s176
      %p180 = scmp.eq.s32.totalorder %s25, 0
      %p181 = por %p179, %p180
      %p182 = scmp.ne.s32.totalorder %s174, %s176
      %p183 = scmp.eq.s32.totalorder %s30, 1
      %p184 = por %p182, %p183
      %p185 = scmp.ne.s32.totalorder %s176, %s177
      %p186 = scmp.eq.s32.totalorder %s30, 0
      %p187 = por %p185, %p186
      %p188 = scmp.ne.s32.totalorder %s176, %s177
      %p189 = scmp.eq.s32.totalorder %s31, 1
      %p190 = por %p188, %p189
      %p192 = scmp.ne.s32.totalorder %s177, %s191
      %p193 = scmp.eq.s32.totalorder %s31, 0
      %p194 = por %p192, %p193
      %s196 = sadd.s32 %s195, 1
      %p199 = scmp.eq.s32.totalorder %s25, 1
      %p200 = scmp.ne.s32.totalorder %s195, %s197
      %p201 = scmp.eq.s32.totalorder %s25, 0
      %p202 = por %p200, %p201
      %p203 = scmp.ne.s32.totalorder %s195, %s197
      %p204 = scmp.eq.s32.totalorder %s30, 1
      %p205 = por %p203, %p204
      %p206 = scmp.ne.s32.totalorder %s197, %s198
      %p207 = scmp.eq.s32.totalorder %s30, 0
      %p208 = por %p206, %p207
      %p209 = scmp.ne.s32.totalorder %s197, %s198
      %p210 = scmp.eq.s32.totalorder %s31, 1
      %p211 = por %p209, %p210
      %p213 = scmp.ne.s32.totalorder %s198, %s212
      %p214 = scmp.eq.s32.totalorder %s31, 0
      %p215 = por %p213, %p214
      %s216 = ssub.s32 %s25, %s32
      %p217 = scmp.eq.s32.totalorder %s216, 0
      %s219 = sadd.s32 %s218, 1
      %s220 = scalar_select %p217, %s218, %s219
      %p223 = pneg %p217
      %p224 = scmp.eq.s32.totalorder %s25, 1
      %p225 = por %p223, %p224
      %p226 = scmp.ne.s32.totalorder %s218, %s221
      %p227 = scmp.eq.s32.totalorder %s25, 0
      %p228 = por %p226, %p227
      %p229 = scmp.ne.s32.totalorder %s218, %s221
      %p230 = scmp.eq.s32.totalorder %s30, 1
      %p231 = por %p229, %p230
      %p232 = scmp.ne.s32.totalorder %s221, %s222
      %p233 = scmp.eq.s32.totalorder %s30, 0
      %p234 = por %p232, %p233
      %p235 = scmp.ne.s32.totalorder %s221, %s222
      %p236 = scmp.eq.s32.totalorder %s31, 1
      %p237 = por %p235, %p236
      %p239 = scmp.ne.s32.totalorder %s222, %s238
      %p240 = scmp.eq.s32.totalorder %s31, 0
      %p241 = por %p239, %p240
      %p242 = scmp.le.s32.totalorder 1, %s25
      %p243 = scmp.lt.s32.totalorder %s25, 3
      %p244 = pnand %p242, %p243
      %p245 = pneg %p244
      // Predicated region
      $region9: #{tpu_custom_call.1} parent=5 // pred_check
        _
      $region10: #{tpu_custom_call.1} parent=5 // pred_check_branch
        %247 = sbr.rel (%p244) target = $region12
      $region11: #{tpu_custom_call.1} parent=5 // pred_region
        %s248 = ssub.s32 %s25, 1
        // Predicated region
        $region13: #{tpu_custom_call.1} parent=11 // pred_check
          %p249 = pneg %p124
        $region14: #{tpu_custom_call.1} parent=11 // pred_check_branch
          %251 = sbr.rel (%p249) target = $region16
        $region15: #{tpu_custom_call.1} parent=11 // pred_region
          %253 = vsyncadd [#allocation9], 0
          %s254 = sshll.u32 %s3, 4
          %s255 = int_to_ptr.hbm [resolvable:$true] %s254
          %s256 = sshll.u32 [#allocation8], 4
          %s257 = int_to_ptr.vmem [resolvable:$true] %s256
          %262 = dma.hbm_to_vmem [thread:$0]  %s255, 512, %s257, [#allocation9], 64, 64, 4
        $region16: #{tpu_custom_call.1} parent=11 // pred_fallthru
          _
        // Predicated region
        $region17: #{tpu_custom_call.1} parent=11 // pred_check
          %p263 = pneg %p145
        $region18: #{tpu_custom_call.1} parent=11 // pred_check_branch
          %265 = sbr.rel (%p263) target = $region20
        $region19: #{tpu_custom_call.1} parent=11 // pred_region
          %267 = vsyncadd [#allocation9], 0
          %s268 = sshll.u32 %s4, 4
          %s269 = int_to_ptr.hbm [resolvable:$true] %s268
          %s270 = sshll.u32 [#allocation10], 4
          %s271 = int_to_ptr.vmem [resolvable:$true] %s270
          %276 = dma.hbm_to_vmem [thread:$0]  %s269, 512, %s271, [#allocation9], 64, 64, 4
        $region20: #{tpu_custom_call.1} parent=11 // pred_fallthru
          _
        // Predicated region
        $region21: #{tpu_custom_call.1} parent=11 // pred_check
          %p277 = pneg %p166
        $region22: #{tpu_custom_call.1} parent=11 // pred_check_branch
          %279 = sbr.rel (%p277) target = $region24
        $region23: #{tpu_custom_call.1} parent=11 // pred_region
          %281 = vsyncadd [#allocation12], 0
          %s282 = sshll.u32 %s5, 4
          %s283 = int_to_ptr.hbm [resolvable:$true] %s282
          %s284 = sshll.u32 [#allocation11], 4
          %s285 = int_to_ptr.vmem [resolvable:$true] %s284
          %290 = dma.hbm_to_vmem [thread:$0]  %s283, 1024, %s285, [#allocation12], 128, 128, 8
        $region24: #{tpu_custom_call.1} parent=11 // pred_fallthru
          _
        // Predicated region
        $region25: #{tpu_custom_call.1} parent=11 // pred_check
          %p291 = pneg %p187
        $region26: #{tpu_custom_call.1} parent=11 // pred_check_branch
          %293 = sbr.rel (%p291) target = $region28
        $region27: #{tpu_custom_call.1} parent=11 // pred_region
          %295 = vsyncadd [#allocation12], 0
          %s296 = sshll.u32 %s6, 4
          %s297 = int_to_ptr.hbm [resolvable:$true] %s296
          %s298 = sshll.u32 [#allocation13], 4
          %s299 = int_to_ptr.vmem [resolvable:$true] %s298
          %304 = dma.hbm_to_vmem [thread:$0]  %s297, 1024, %s299, [#allocation12], 128, 128, 8
        $region28: #{tpu_custom_call.1} parent=11 // pred_fallthru
          _
        // Predicated region
        $region29: #{tpu_custom_call.1} parent=11 // pred_check
          %p305 = pneg %p208
        $region30: #{tpu_custom_call.1} parent=11 // pred_check_branch
          %307 = sbr.rel (%p305) target = $region32
        $region31: #{tpu_custom_call.1} parent=11 // pred_region
          _
        $region32: #{tpu_custom_call.1} parent=11 // pred_fallthru
          _
      $region12: #{tpu_custom_call.1} parent=5 // pred_fallthru
        _
      %p308 = scmp.lt.s32.totalorder %s25, 2
      // Predicated region
      $region33: #{tpu_custom_call.1} parent=5 // pred_check
        %p309 = pneg %p308
      $region34: #{tpu_custom_call.1} parent=5 // pred_check_branch
        %311 = sbr.rel (%p309) target = $region36
      $region35: #{tpu_custom_call.1} parent=5 // pred_region
        // Predicated region
        $region37: #{tpu_custom_call.1} parent=35 // pred_check
          %p312 = pneg %p45
        $region38: #{tpu_custom_call.1} parent=35 // pred_check_branch
          %314 = sbr.rel (%p312) target = $region40
        $region39: #{tpu_custom_call.1} parent=35 // pred_region
          %s315 = sand.u32 %s35, 1
          %s316 = scalar_lea.sflag [#allocation3], %s315
          %s317 = sand.u32 %s35, 1
          %s318 = smul.addr %s317, 8
          %s319 = scalar_lea.vmem [#allocation2], %s318
          %s320 = smul.u32 2, %s25
          %322 = vsyncadd %s316, 0
          %s323 = smul.addr %s320, 4
          %s324 = scalar_lea.hbm %s0, %s323
          %s325 = sshll.u32 %s324, 4
          %s326 = int_to_ptr.hbm [resolvable:$true] %s325
          %s327 = sshll.u32 %s319, 4
          %s328 = int_to_ptr.vmem [resolvable:$true] %s327
          %333 = dma.hbm_to_vmem [thread:$0]  %s326, 128, %s328, %s316, 64, 64, 4
        $region40: #{tpu_custom_call.1} parent=35 // pred_fallthru
          _
        // Predicated region
        $region41: #{tpu_custom_call.1} parent=35 // pred_check
          %p334 = pneg %p71
        $region42: #{tpu_custom_call.1} parent=35 // pred_check_branch
          %336 = sbr.rel (%p334) target = $region44
        $region43: #{tpu_custom_call.1} parent=35 // pred_region
          %s337 = sand.u32 %s25, 1
          %s338 = scalar_lea.sflag [#allocation6], %s337
          %s339 = sand.u32 %s61, 1
          %s340 = smul.addr %s339, 8
          %s341 = scalar_lea.vmem [#allocation5], %s340
          %s342 = smul.u32 2, %s25
          %344 = vsyncadd %s338, 0
          %s345 = smul.addr %s342, 4
          %s346 = scalar_lea.hbm %s1, %s345
          %s347 = sshll.u32 %s346, 4
          %s348 = int_to_ptr.hbm [resolvable:$true] %s347
          %s349 = sshll.u32 %s341, 4
          %s350 = int_to_ptr.vmem [resolvable:$true] %s349
          %355 = dma.hbm_to_vmem [thread:$0]  %s348, 128, %s350, %s338, 64, 64, 4
        $region44: #{tpu_custom_call.1} parent=35 // pred_fallthru
          _
        // Predicated region
        $region45: #{tpu_custom_call.1} parent=35 // pred_check
          %p356 = pneg %p97
        $region46: #{tpu_custom_call.1} parent=35 // pred_check_branch
          %358 = sbr.rel (%p356) target = $region48
        $region47: #{tpu_custom_call.1} parent=35 // pred_region
          %s359 = sand.u32 %s25, 1
          %s360 = scalar_lea.sflag [#allocation6], %s359
          %s361 = sand.u32 %s87, 1
          %s362 = smul.addr %s361, 16
          %s363 = scalar_lea.vmem [#allocation7], %s362
          %s364 = smul.u32 2, %s25
          %366 = vsyncadd %s360, 0
          %s367 = smul.addr %s364, 8
          %s368 = scalar_lea.hbm %s2, %s367
          %s369 = sshll.u32 %s368, 4
          %s370 = int_to_ptr.hbm [resolvable:$true] %s369
          %s371 = sshll.u32 %s363, 4
          %s372 = int_to_ptr.vmem [resolvable:$true] %s371
          %377 = dma.hbm_to_vmem [thread:$0]  %s370, 256, %s372, %s360, 128, 128, 8
        $region48: #{tpu_custom_call.1} parent=35 // pred_fallthru
          _
      $region36: #{tpu_custom_call.1} parent=5 // pred_fallthru
        _
      %p378 = scmp.le.s32.totalorder 1, %s25
      %p379 = scmp.lt.s32.totalorder %s25, 3
      %p380 = pnand %p378, %p379
      %p381 = pneg %p380
      // Predicated region
      $region49: #{tpu_custom_call.1} parent=5 // pred_check
        _
      $region50: #{tpu_custom_call.1} parent=5 // pred_check_branch
        %383 = sbr.rel (%p380) target = $region52
      $region51: #{tpu_custom_call.1} parent=5 // pred_region
        %s384 = ssub.s32 %s25, 1
        %s385 = sand.u32 %s38, 1
        %s386 = scalar_lea.sflag [#allocation3], %s385
        %s387 = sand.u32 %s38, 1
        %s388 = smul.addr %s387, 8
        %s389 = scalar_lea.vmem [#allocation2], %s388
        // Predicated region
        $region53: #{tpu_custom_call.1} parent=51 // pred_check
          %p390 = pneg %p51
        $region54: #{tpu_custom_call.1} parent=51 // pred_check_branch
          %392 = sbr.rel (%p390) target = $region56
        $region55: #{tpu_custom_call.1} parent=51 // pred_region
          %394 = dma.done %s386, 128
        $region56: #{tpu_custom_call.1} parent=51 // pred_fallthru
          _
        %s395 = sand.u32 %s30, 1
        %s396 = scalar_lea.sflag [#allocation6], %s395
        %s397 = sand.u32 %s64, 1
        %s398 = smul.addr %s397, 8
        %s399 = scalar_lea.vmem [#allocation5], %s398
        // Predicated region
        $region57: #{tpu_custom_call.1} parent=51 // pred_check
          %p400 = pneg %p77
        $region58: #{tpu_custom_call.1} parent=51 // pred_check_branch
          %402 = sbr.rel (%p400) target = $region60
        $region59: #{tpu_custom_call.1} parent=51 // pred_region
          %404 = dma.done %s396, 128
        $region60: #{tpu_custom_call.1} parent=51 // pred_fallthru
          _
        %s405 = sand.u32 %s30, 1
        %s406 = scalar_lea.sflag [#allocation6], %s405
        %s407 = sand.u32 %s90, 1
        %s408 = smul.addr %s407, 16
        %s409 = scalar_lea.vmem [#allocation7], %s408
        // Predicated region
        $region61: #{tpu_custom_call.1} parent=51 // pred_check
          %p410 = pneg %p103
        $region62: #{tpu_custom_call.1} parent=51 // pred_check_branch
          %412 = sbr.rel (%p410) target = $region64
        $region63: #{tpu_custom_call.1} parent=51 // pred_region
          %414 = dma.done %s406, 256
        $region64: #{tpu_custom_call.1} parent=51 // pred_fallthru
          _
        // Predicated region
        $region65: #{tpu_custom_call.1} parent=51 // pred_check
          %p415 = pneg %p124
        $region66: #{tpu_custom_call.1} parent=51 // pred_check_branch
          %417 = sbr.rel (%p415) target = $region68
        $region67: #{tpu_custom_call.1} parent=51 // pred_region
          %419 = dma.done [#allocation9], 512
        $region68: #{tpu_custom_call.1} parent=51 // pred_fallthru
          _
        // Predicated region
        $region69: #{tpu_custom_call.1} parent=51 // pred_check
          %p420 = pneg %p145
        $region70: #{tpu_custom_call.1} parent=51 // pred_check_branch
          %422 = sbr.rel (%p420) target = $region72
        $region71: #{tpu_custom_call.1} parent=51 // pred_region
          %424 = dma.done [#allocation9], 512
        $region72: #{tpu_custom_call.1} parent=51 // pred_fallthru
          _
        // Predicated region
        $region73: #{tpu_custom_call.1} parent=51 // pred_check
          %p425 = pneg %p166
        $region74: #{tpu_custom_call.1} parent=51 // pred_check_branch
          %427 = sbr.rel (%p425) target = $region76
        $region75: #{tpu_custom_call.1} parent=51 // pred_region
          %429 = dma.done [#allocation12], 1024
        $region76: #{tpu_custom_call.1} parent=51 // pred_fallthru
          _
        // Predicated region
        $region77: #{tpu_custom_call.1} parent=51 // pred_check
          %p430 = pneg %p187
        $region78: #{tpu_custom_call.1} parent=51 // pred_check_branch
          %432 = sbr.rel (%p430) target = $region80
        $region79: #{tpu_custom_call.1} parent=51 // pred_region
          %434 = dma.done [#allocation12], 1024
        $region80: #{tpu_custom_call.1} parent=51 // pred_fallthru
          _
        %s435 = sand.u32 %s38, 1
        %s436 = scalar_lea.sflag [#allocation3], %s435
        %s437 = sand.u32 %s38, 1
        %s438 = smul.addr %s437, 8
        %s439 = scalar_lea.vmem [#allocation2], %s438
        %p440 = pneg %p51
        %p441 = pneg %p48
        %s442 = sand.u32 %s30, 1
        %s443 = scalar_lea.sflag [#allocation6], %s442
        %s444 = sand.u32 %s64, 1
        %s445 = smul.addr %s444, 8
        %s446 = scalar_lea.vmem [#allocation5], %s445
        %p447 = pneg %p77
        %p448 = pneg %p74
        %s449 = sand.u32 %s30, 1
        %s450 = scalar_lea.sflag [#allocation6], %s449
        %s451 = sand.u32 %s90, 1
        %s452 = smul.addr %s451, 16
        %s453 = scalar_lea.vmem [#allocation7], %s452
        %p454 = pneg %p103
        %p455 = pneg %p100
        %p456 = pneg %p124
        %p457 = pneg %p121
        %p458 = pneg %p145
        %p459 = pneg %p142
        %p460 = pneg %p166
        %p461 = pneg %p163
        %p462 = pneg %p187
        %p463 = pneg %p184
        %p464 = pneg %p208
        %p465 = pneg %p205
        %p466 = pneg %p234
        %p467 = pneg %p231
        %s468 = sand.u32 %s221, 1
        %s469 = scalar_lea.sflag [#allocation4], %s468
        %s470 = sand.u32 %s221, 1
        %s471 = smul.addr %s470, 16
        %s472 = scalar_lea.vmem [#allocation14], %s471
        %s473 = smul.u32 2, %s30
        %s474 = smul.u32 2, %s30
        %s475 = smul.u32 2, %s30
        %s476 = smul.u32 2, %s30
        %v478 = vld [vmem:[%s389] sm:$0xf]
        %v479 = vld [vmem:[%s389 + $0x4] sm:$0xf]
        %v480 = vld [vmem:[%s399] sm:$0xf]
        %v481 = vld [vmem:[%s399 + $0x4] sm:$0xf]
        %v482 = vld [vmem:[%s409] sm:$0xff]
        %v483 = vld [vmem:[%s409 + $0x8] sm:$0xff]
        %v484 = vld [vmem:[#allocation8] sm:$0xf]
        %v485 = vld [vmem:[#allocation8 + $0x4] sm:$0xf]
        %v486 = vld [vmem:[#allocation8 + $0x8] sm:$0xf]
        %v487 = vld [vmem:[#allocation8 + $0xc] sm:$0xf]
        %v488 = vld [vmem:[#allocation8 + $0x10] sm:$0xf]
        %v489 = vld [vmem:[#allocation8 + $0x14] sm:$0xf]
        %v490 = vld [vmem:[#allocation8 + $0x18] sm:$0xf]
        %v491 = vld [vmem:[#allocation8 + $0x1c] sm:$0xf]
        %v494 = vunpack.c.l.b16 %v478
        %v495 = vunpack.c.l.b16 %v479
        %v496 = vpack.c.b16 %v495, %v494
        %v505 = vunpack.c.l.b16 %v484
        %v506 = vunpack.c.l.b16 %v485
        %v507 = vunpack.c.l.b16 %v486
        %v508 = vunpack.c.l.b16 %v487
        %v509 = vunpack.c.l.b16 %v488
        %v510 = vunpack.c.l.b16 %v489
        %v511 = vunpack.c.l.b16 %v490
        %v512 = vunpack.c.l.b16 %v491
        %v513 = vpack.c.b16 %v506, %v505
        %v514 = vpack.c.b16 %v508, %v507
        %v515 = vpack.c.b16 %v510, %v509
        %v516 = vpack.c.b16 %v512, %v511
        %vm521 = vcmask 523264
        %v523 = vsel %vm521, %v496, 0
        %525 = vmatpush.bf16.msra.mxu0 0
        %526 = vmatpush.bf16.msra.mxu0 0
        %527 = vmatpush.bf16.msra.mxu0 0
        %528 = vmatpush.bf16.msra.mxu0 0
        %529 = vmatpush.bf16.msra.mxu0 %v516
        %530 = vmatpush.bf16.msra.mxu0 %v515
        %531 = vmatpush.bf16.msra.mxu0 %v514
        %532 = vmatpush.bf16.msra.mxu0 %v513
        %533 = vmatmul.bf16.gmra.mxu0 %v523
        %v534 = vpop.f32.mrf.mxu0
        %v535 = vadd.f32 0.0, %v534
        %v536 = vpop.f32.mrf.mxu0
        %v537 = vadd.f32 0.0, %v536
        %538 = vdwg.mxu0
        %v539 = vld [vmem:[#allocation10] sm:$0xf]
        %v540 = vld [vmem:[#allocation10 + $0x4] sm:$0xf]
        %v541 = vld [vmem:[#allocation10 + $0x8] sm:$0xf]
        %v542 = vld [vmem:[#allocation10 + $0xc] sm:$0xf]
        %v543 = vld [vmem:[#allocation10 + $0x10] sm:$0xf]
        %v544 = vld [vmem:[#allocation10 + $0x14] sm:$0xf]
        %v545 = vld [vmem:[#allocation10 + $0x18] sm:$0xf]
        %v546 = vld [vmem:[#allocation10 + $0x1c] sm:$0xf]
        %v549 = vunpack.c.l.b16 %v480
        %v550 = vunpack.c.l.b16 %v481
        %v551 = vpack.c.b16 %v550, %v549
        %v560 = vunpack.c.l.b16 %v539
        %v561 = vunpack.c.l.b16 %v540
        %v562 = vunpack.c.l.b16 %v541
        %v563 = vunpack.c.l.b16 %v542
        %v564 = vunpack.c.l.b16 %v543
        %v565 = vunpack.c.l.b16 %v544
        %v566 = vunpack.c.l.b16 %v545
        %v567 = vunpack.c.l.b16 %v546
        %v568 = vpack.c.b16 %v561, %v560
        %v569 = vpack.c.b16 %v563, %v562
        %v570 = vpack.c.b16 %v565, %v564
        %v571 = vpack.c.b16 %v567, %v566
        %v577 = vsel %vm521, %v551, 0
        %579 = vmatpush.bf16.msra.mxu0 0
        %580 = vmatpush.bf16.msra.mxu0 0
        %581 = vmatpush.bf16.msra.mxu0 0
        %582 = vmatpush.bf16.msra.mxu0 0
        %583 = vmatpush.bf16.msra.mxu0 %v571
        %584 = vmatpush.bf16.msra.mxu0 %v570
        %585 = vmatpush.bf16.msra.mxu0 %v569
        %586 = vmatpush.bf16.msra.mxu0 %v568
        %587 = vmatmul.bf16.gmra.mxu0 %v577
        %v588 = vpop.f32.mrf.mxu0
        %v589 = vadd.f32 0.0, %v588
        %v590 = vpop.f32.mrf.mxu0
        %v591 = vadd.f32 0.0, %v590
        %592 = vdwg.mxu0
        %v593 = vmul.f32 %v535, %v589
        %v594 = vmul.f32 %v537, %v591
        %v595 = vld [vmem:[#allocation11] sm:$0xff]
        %v596 = vld [vmem:[#allocation11 + $0x8] sm:$0xff]
        %v597 = vld [vmem:[#allocation11 + $0x10] sm:$0xff]
        %v598 = vld [vmem:[#allocation11 + $0x18] sm:$0xff]
        %v599 = vld [vmem:[#allocation11 + $0x20] sm:$0xff]
        %v600 = vld [vmem:[#allocation11 + $0x28] sm:$0xff]
        %v601 = vld [vmem:[#allocation11 + $0x30] sm:$0xff]
        %v602 = vld [vmem:[#allocation11 + $0x38] sm:$0xff]
        %v603 = vpack.c.bf16 %v594, %v593
        %v604 = vld [vmem:[#allocation13] sm:$0xff]
        %v605 = vld [vmem:[#allocation13 + $0x8] sm:$0xff]
        %v606 = vld [vmem:[#allocation13 + $0x10] sm:$0xff]
        %v607 = vld [vmem:[#allocation13 + $0x18] sm:$0xff]
        %v608 = vld [vmem:[#allocation13 + $0x20] sm:$0xff]
        %v609 = vld [vmem:[#allocation13 + $0x28] sm:$0xff]
        %v610 = vld [vmem:[#allocation13 + $0x30] sm:$0xff]
        %v611 = vld [vmem:[#allocation13 + $0x38] sm:$0xff]
        %v620 = vunpack.c.l.b16 %v604
        %v621 = vunpack.c.h.b16 %v604
        %v622 = vunpack.c.l.b16 %v605
        %v623 = vunpack.c.h.b16 %v605
        %v624 = vunpack.c.l.b16 %v606
        %v625 = vunpack.c.h.b16 %v606
        %v626 = vunpack.c.l.b16 %v607
        %v627 = vunpack.c.h.b16 %v607
        %v628 = vunpack.c.l.b16 %v608
        %v629 = vunpack.c.h.b16 %v608
        %v630 = vunpack.c.l.b16 %v609
        %v631 = vunpack.c.h.b16 %v609
        %v632 = vunpack.c.l.b16 %v610
        %v633 = vunpack.c.h.b16 %v610
        %v634 = vunpack.c.l.b16 %v611
        %v635 = vunpack.c.h.b16 %v611
        %v636 = vpack.c.b16 %v622, %v620
        %v637 = vpack.c.b16 %v623, %v621
        %v638 = vpack.c.b16 %v626, %v624
        %v639 = vpack.c.b16 %v627, %v625
        %v640 = vpack.c.b16 %v630, %v628
        %v641 = vpack.c.b16 %v631, %v629
        %v642 = vpack.c.b16 %v634, %v632
        %v643 = vpack.c.b16 %v635, %v633
        %v653 = vsel %vm521, %v603, 0
        %655 = vmatpush.bf16.msra.mxu0 0
        %656 = vmatpush.bf16.msra.mxu0 0
        %657 = vmatpush.bf16.msra.mxu0 0
        %658 = vmatpush.bf16.msra.mxu0 0
        %659 = vmatpush.bf16.msra.mxu0 %v642
        %660 = vmatpush.bf16.msra.mxu0 %v640
        %661 = vmatpush.bf16.msra.mxu0 %v638
        %662 = vmatpush.bf16.msra.mxu0 %v636
        %663 = vmatmul.bf16.gmra.mxu0 %v653
        %v664 = vpop.f32.mrf.mxu0
        %v665 = vadd.f32 0.0, %v664
        %v666 = vpop.f32.mrf.mxu0
        %v667 = vadd.f32 0.0, %v666
        %668 = vdwg.mxu0
        %669 = vmatpush.bf16.msra.mxu0 0
        %670 = vmatpush.bf16.msra.mxu0 0
        %671 = vmatpush.bf16.msra.mxu0 0
        %672 = vmatpush.bf16.msra.mxu0 0
        %673 = vmatpush.bf16.msra.mxu0 %v643
        %674 = vmatpush.bf16.msra.mxu0 %v641
        %675 = vmatpush.bf16.msra.mxu0 %v639
        %676 = vmatpush.bf16.msra.mxu0 %v637
        %677 = vmatmul.bf16.gmra.mxu0 %v653
        %v678 = vpop.f32.mrf.mxu0
        %v679 = vadd.f32 0.0, %v678
        %v680 = vpop.f32.mrf.mxu0
        %v681 = vadd.f32 0.0, %v680
        %682 = vdwg.mxu0
        %v691 = vunpack.c.l.b16 %v595
        %v692 = vunpack.c.h.b16 %v595
        %v693 = vunpack.c.l.b16 %v596
        %v694 = vunpack.c.h.b16 %v596
        %v695 = vunpack.c.l.b16 %v597
        %v696 = vunpack.c.h.b16 %v597
        %v697 = vunpack.c.l.b16 %v598
        %v698 = vunpack.c.h.b16 %v598
        %v699 = vunpack.c.l.b16 %v599
        %v700 = vunpack.c.h.b16 %v599
        %v701 = vunpack.c.l.b16 %v600
        %v702 = vunpack.c.h.b16 %v600
        %v703 = vunpack.c.l.b16 %v601
        %v704 = vunpack.c.h.b16 %v601
        %v705 = vunpack.c.l.b16 %v602
        %v706 = vunpack.c.h.b16 %v602
        %v707 = vpack.c.b16 %v693, %v691
        %v708 = vpack.c.b16 %v694, %v692
        %v709 = vpack.c.b16 %v697, %v695
        %v710 = vpack.c.b16 %v698, %v696
        %v711 = vpack.c.b16 %v701, %v699
        %v712 = vpack.c.b16 %v702, %v700
        %v713 = vpack.c.b16 %v705, %v703
        %v714 = vpack.c.b16 %v706, %v704
        %723 = vmatpush.bf16.msra.mxu0 0
        %724 = vmatpush.bf16.msra.mxu0 0
        %725 = vmatpush.bf16.msra.mxu0 0
        %726 = vmatpush.bf16.msra.mxu0 0
        %727 = vmatpush.bf16.msra.mxu0 %v713
        %728 = vmatpush.bf16.msra.mxu0 %v711
        %729 = vmatpush.bf16.msra.mxu0 %v709
        %730 = vmatpush.bf16.msra.mxu0 %v707
        %731 = vmatmul.bf16.gmra.mxu0 %v523
        %v732 = vpop.f32.mrf.mxu0
        %v733 = vadd.f32 %v665, %v732
        %v734 = vpop.f32.mrf.mxu0
        %v735 = vadd.f32 %v667, %v734
        %736 = vdwg.mxu0
        %737 = vmatpush.bf16.msra.mxu0 0
        %738 = vmatpush.bf16.msra.mxu0 0
        %739 = vmatpush.bf16.msra.mxu0 0
        %740 = vmatpush.bf16.msra.mxu0 0
        %741 = vmatpush.bf16.msra.mxu0 %v714
        %742 = vmatpush.bf16.msra.mxu0 %v712
        %743 = vmatpush.bf16.msra.mxu0 %v710
        %744 = vmatpush.bf16.msra.mxu0 %v708
        %745 = vmatmul.bf16.gmra.mxu0 %v523
        %v746 = vpop.f32.mrf.mxu0
        %v747 = vadd.f32 %v679, %v746
        %v748 = vpop.f32.mrf.mxu0
        %v749 = vadd.f32 %v681, %v748
        %750 = vdwg.mxu0
        %v751 = vld [vmem:[%s7] sm:$0x3]
        %v753 = vperm.slane %v751, 0
        %v754 = vperm.slane %v751, 1
        %v757 = vadd.f32 %v733, %v753
        %v758 = vadd.f32 %v747, %v754
        %v759 = vadd.f32 %v735, %v753
        %v760 = vadd.f32 %v749, %v754
        %v761 = vxor.u32 %v757, 2147483648
        %v762 = vxor.u32 %v758, 2147483648
        %v763 = vxor.u32 %v759, 2147483648
        %v764 = vxor.u32 %v760, 2147483648
        %v765 = vmul.f32 %v761, 1.442695
        %v766 = vpow.pop %v765
        %v767 = vmul.f32 %v762, 1.442695
        %v768 = vpow.pop %v767
        %v769 = vmul.f32 %v763, 1.442695
        %v770 = vpow.pop %v769
        %v771 = vmul.f32 %v764, 1.442695
        %v772 = vpow.pop %v771
        %v773 = vadd.f32 %v766, 1.0
        %v774 = vadd.f32 %v768, 1.0
        %v775 = vadd.f32 %v770, 1.0
        %v776 = vadd.f32 %v772, 1.0
        %v777 = vrcp.pop %v773
        %v778 = vmul.f32 %v773, %v777
        %v779 = vsub.f32 1.0, %v778
        %v780 = vmul.f32 %v777, %v779
        %v781 = vadd.f32 %v777, %v780
        %vm782 = vweird.f32 %v773
        %vm783 = vweird.f32 %v777
        %vm784 = vmor %vm782, %vm783
        %v785 = vsel %vm784, %v777, %v781
        %v786 = vand.u32 2147483647, %v773
        %vm787 = vcmp.eq.f32.partialorder %v786, 8.507059e+37
        %v788 = vand.u32 %v773, 2147483648
        %v789 = vor.u32 1.1754944e-38, %v788
        %v790 = vsel %vm787, %v789, %v785
        %v791 = vmul.f32 1.0, %v790
        %v792 = vrcp.pop %v774
        %v793 = vmul.f32 %v774, %v792
        %v794 = vsub.f32 1.0, %v793
        %v795 = vmul.f32 %v792, %v794
        %v796 = vadd.f32 %v792, %v795
        %vm797 = vweird.f32 %v774
        %vm798 = vweird.f32 %v792
        %vm799 = vmor %vm797, %vm798
        %v800 = vsel %vm799, %v792, %v796
        %v801 = vand.u32 2147483647, %v774
        %vm802 = vcmp.eq.f32.partialorder %v801, 8.507059e+37
        %v803 = vand.u32 %v774, 2147483648
        %v804 = vor.u32 1.1754944e-38, %v803
        %v805 = vsel %vm802, %v804, %v800
        %v806 = vmul.f32 1.0, %v805
        %v807 = vrcp.pop %v775
        %v808 = vmul.f32 %v775, %v807
        %v809 = vsub.f32 1.0, %v808
        %v810 = vmul.f32 %v807, %v809
        %v811 = vadd.f32 %v807, %v810
        %vm812 = vweird.f32 %v775
        %vm813 = vweird.f32 %v807
        %vm814 = vmor %vm812, %vm813
        %v815 = vsel %vm814, %v807, %v811
        %v816 = vand.u32 2147483647, %v775
        %vm817 = vcmp.eq.f32.partialorder %v816, 8.507059e+37
        %v818 = vand.u32 %v775, 2147483648
        %v819 = vor.u32 1.1754944e-38, %v818
        %v820 = vsel %vm817, %v819, %v815
        %v821 = vmul.f32 1.0, %v820
        %v822 = vrcp.pop %v776
        %v823 = vmul.f32 %v776, %v822
        %v824 = vsub.f32 1.0, %v823
        %v825 = vmul.f32 %v822, %v824
        %v826 = vadd.f32 %v822, %v825
        %vm827 = vweird.f32 %v776
        %vm828 = vweird.f32 %v822
        %vm829 = vmor %vm827, %vm828
        %v830 = vsel %vm829, %v822, %v826
        %v831 = vand.u32 2147483647, %v776
        %vm832 = vcmp.eq.f32.partialorder %v831, 8.507059e+37
        %v833 = vand.u32 %v776, 2147483648
        %v834 = vor.u32 1.1754944e-38, %v833
        %v835 = vsel %vm832, %v834, %v830
        %v836 = vmul.f32 1.0, %v835
        %v837 = vtanh.pop %v758
        %v838 = vtanh.pop %v760
        %841 = vrot.lane.b32.xlu0 %v482, 64
        %v842 = vpop.permute.xlu0 %841
        %843 = vrot.lane.b32.xlu0 %v483, 64
        %v844 = vpop.permute.xlu0 %843
        %v847 = vmul.f32 %v791, %v842
        %v848 = vmul.f32 %v821, %v844
        %851 = vrot.lane.b32.xlu0 %v837, 64
        %v852 = vpop.permute.xlu0 %851
        %853 = vrot.lane.b32.xlu0 %v838, 64
        %v854 = vpop.permute.xlu0 %853
        %v857 = vmul.f32 %v791, %v852
        %v858 = vmul.f32 %v821, %v854
        %861 = vrot.lane.b32.xlu0 %v857, 64
        %v862 = vpop.permute.xlu0 %861
        %863 = vrot.lane.b32.xlu0 %v858, 64
        %v864 = vpop.permute.xlu0 %863
        %v867 = vadd.f32 %v847, %v862
        %v868 = vadd.f32 %v848, %v864
        %v869 = vtanh.pop %v867
        %v870 = vtanh.pop %v868
        %873 = vrot.lane.b32.xlu0 %v869, 64
        %v874 = vpop.permute.xlu0 %873
        %875 = vrot.lane.b32.xlu0 %v870, 64
        %v876 = vpop.permute.xlu0 %875
        %v879 = vmul.f32 %v806, %v874
        %v880 = vmul.f32 %v836, %v876
        %v881 = vsel %vm521, %v879, %v867
        %v882 = vsel %vm521, %v880, %v868
        %883 = vst [vmem:[%s472] sm:$0xff] %v881
        %884 = vst [vmem:[%s472 + $0x8] sm:$0xff] %v882
        %s885 = sand.u32 %s221, 1
        %s886 = scalar_lea.sflag [#allocation4], %s885
        %s887 = sand.u32 %s221, 1
        %s888 = smul.addr %s887, 16
        %s889 = scalar_lea.vmem [#allocation14], %s888
        // Predicated region
        $region81: #{tpu_custom_call.1} parent=51 // pred_check
          %p890 = pneg %p231
        $region82: #{tpu_custom_call.1} parent=51 // pred_check_branch
          %892 = sbr.rel (%p890) target = $region84
        $region83: #{tpu_custom_call.1} parent=51 // pred_region
          %s893 = smul.u32 2, %s30
          %895 = vsyncadd %s886, 0
          %s896 = smul.addr %s893, 8
          %s897 = scalar_lea.hbm %s8, %s896
          %s898 = sshll.u32 %s889, 4
          %s899 = int_to_ptr.vmem [resolvable:$true] %s898
          %s900 = sshll.u32 %s897, 4
          %s901 = int_to_ptr.hbm [resolvable:$true] %s900
          %906 = dma.vmem_to_hbm [thread:$0]  %s899, 256, %s901, %s886, 128, 128, 8
        $region84: #{tpu_custom_call.1} parent=51 // pred_fallthru
          _
      $region52: #{tpu_custom_call.1} parent=5 // pred_fallthru
        _
      %p907 = scmp.le.s32.totalorder 2, %s25
      // Predicated region
      $region85: #{tpu_custom_call.1} parent=5 // pred_check
        %p908 = pneg %p907
      $region86: #{tpu_custom_call.1} parent=5 // pred_check_branch
        %910 = sbr.rel (%p908) target = $region88
      $region87: #{tpu_custom_call.1} parent=5 // pred_region
        %s911 = ssub.s32 %s25, 2
        // Predicated region
        $region89: #{tpu_custom_call.1} parent=87 // pred_check
          %p912 = pneg %p237
        $region90: #{tpu_custom_call.1} parent=87 // pred_check_branch
          %914 = sbr.rel (%p912) target = $region92
        $region91: #{tpu_custom_call.1} parent=87 // pred_region
          %s915 = sand.u32 %s222, 1
          %s916 = scalar_lea.sflag [#allocation4], %s915
          %s917 = sand.u32 %s222, 1
          %s918 = smul.addr %s917, 16
          %s919 = scalar_lea.vmem [#allocation14], %s918
          %921 = dma.done %s916, 256
        $region92: #{tpu_custom_call.1} parent=87 // pred_fallthru
          _
      $region88: #{tpu_custom_call.1} parent=5 // pred_fallthru
        _
    $region6: #{tpu_custom_call.1} parent=1 // loop_footer
      %s29 = sadd.s32 1, %s25
    $region7: #{tpu_custom_call.1} parent=1 // loop_footer_branch
      %24 = sbr.rel target = $region3
    $region8: #{tpu_custom_call.1} parent=1 // loop_exit
      _
    %922 = vsyncpa [#allocation3], 1
    %s923 = scalar_lea.sflag [#allocation3], 1
    %924 = vsyncpa %s923, 1
    %925 = vsyncpa [#allocation6], 1
    %s926 = scalar_lea.sflag [#allocation6], 1
    %927 = vsyncpa %s926, 1
    %928 = vsyncpa [#allocation9], 1
    %929 = vsyncpa [#allocation12], 1
    %930 = vsyncpa [#allocation4], 1
    %s931 = scalar_lea.sflag [#allocation4], 1
    %932 = vsyncpa %s931, 1

</llo_original>
